<compile_context>
chip_gen: v7x
topology: tpu7x:2x2x1
jax: 0.10.0
libtpu: 0.0.40
codegen_flags: <defaults>
</compile_context>

<pallas_src>
import jax
import jax.numpy as jnp
from jax.experimental import pallas as pl
from jax.experimental.pallas import tpu as pltpu

HIDDEN = 32              # config.hidden_size
NUM_CLASSES = 2          # out_proj output features
MAX_SOURCE_LENGTH = 8
VOCAB = 50
PAD_TOKEN_ID = 0

OUT_W = 5                # rows: [logit0, logit1, prob0, prob1, lse]
LANE = 128               # batch now rides the lane axis
MAX_TILE_ROWS = 2048     # batch-lane tile (multiple of 128; KB-scale in VMEM)


def _round_up(x, m):
    return ((x + m - 1) // m) * m


def clone_head_kernel(ids_ref, ml_ref, mr_ref, b1_ref, w2t_ref, b2_ref, out_ref):
    # ids : (2, T)  int32  — first-token id of left / right snippet (T on lanes)
    # ml  : (H, Vp) f32    — (emb @ W1[:H, :]).T  (W1 pre-folded into the table)
    # mr  : (H, Vp) f32    — (emb @ W1[H:, :]).T
    # b1  : (H, 1)  f32      w2t : (2, H) f32      b2 : (2, 1) f32
    # out : (5, T)  f32    — rows: logit0, logit1, prob0, prob1, lse
    ids = ids_ref[...]                       # (2, T)
    ml = ml_ref[...]                         # (H, Vp)
    mr = mr_ref[...]
    vp = ml.shape[1]
    t = ids.shape[1]

    # One-hot gather built on the sublane (vocab) axis, batch on lanes: (Vp, T).
    vocab_iota = jax.lax.broadcasted_iota(jnp.int32, (vp, t), 0)
    oh_l = (vocab_iota == ids[0:1, :]).astype(jnp.float32)        # (Vp, T)
    oh_r = (vocab_iota == ids[1:2, :]).astype(jnp.float32)        # (Vp, T)

    # Fused embedding-gather + dense(2H -> H): (H, Vp) @ (Vp, T) = (H, T).
    pre = (
        jnp.dot(ml, oh_l, preferred_element_type=jnp.float32)
        + jnp.dot(mr, oh_r, preferred_element_type=jnp.float32)
        + b1_ref[...]
    )
    h = jnp.tanh(pre)                        # (H, T)

    # out_proj(H -> 2): (2, H) @ (H, T) = (2, T).
    logits = (
        jnp.dot(w2t_ref[...], h, preferred_element_type=jnp.float32) + b2_ref[...]
    )

    # 2-class softmax + per-row logsumexp (exp/log/recip go to the EUP slot).
    l0 = logits[0:1, :]
    l1 = logits[1:2, :]
    m = jnp.maximum(l0, l1)
    e0 = jnp.exp(l0 - m)
    e1 = jnp.exp(l1 - m)
    s = e0 + e1                              # in [1, 2]
    inv = pl.reciprocal(s, approx=False)
    lse = m + jnp.log(s)

    # Direct row stores — full lane width, no concat, no pad columns.
    out_ref[0:2, :] = logits
    out_ref[2:3, :] = e0 * inv
    out_ref[3:4, :] = e1 * inv
    out_ref[4:5, :] = lse


def clone_head(pair_ids, emb, w1, b1, w2, b2):
    """pair_ids: [N, 2] int32 first-token ids.  Returns a (OUT_W, N) f32 slab."""
    n = pair_ids.shape[0]

    # One-time algebraic fold of W1 into the embedding table; feature dims go
    # on sublanes so the batch can ride the lane axis inside the kernel.
    ml_t = (emb @ w1[:HIDDEN, :]).T                     # (H, Vp)
    mr_t = (emb @ w1[HIDDEN:, :]).T                     # (H, Vp)
    b1_c = b1.reshape(HIDDEN, 1)
    w2_t = w2.T                                         # (2, H)
    b2_c = b2.reshape(NUM_CLASSES, 1)

    # Pad vocab (lane axis of ml/mr, sublane axis of the in-kernel one-hot) to
    # a multiple of 8; padded columns are zero and never selected (ids < VOCAB).
    vp = ml_t.shape[1]
    vp_pad = _round_up(vp, 8)
    if vp_pad != vp:
        ml_t = jnp.pad(ml_t, ((0, 0), (0, vp_pad - vp)))
        mr_t = jnp.pad(mr_t, ((0, 0), (0, vp_pad - vp)))

    # Batch (lane) tiling: multiple of 128, no padding blow-up, and >= 2
    # parallel grid steps when there is enough work (v7x has 2 TensorCores).
    n_ceil = _round_up(max(n, 1), LANE)
    num_tiles = pl.cdiv(n_ceil, MAX_TILE_ROWS)
    if n_ceil >= 2 * LANE:
        num_tiles = max(num_tiles, 2)
    tile_n = _round_up(pl.cdiv(n_ceil, num_tiles), LANE)
    n_pad = tile_n * num_tiles

    ids_t = jnp.pad(pair_ids, ((0, n_pad - n), (0, 0))).T.astype(jnp.int32)  # (2, n_pad)

    out = pl.pallas_call(
        clone_head_kernel,
        out_shape=jax.ShapeDtypeStruct((OUT_W, n_pad), jnp.float32),
        grid_spec=pltpu.PrefetchScalarGridSpec(
            num_scalar_prefetch=0,
            grid=(num_tiles,),
            in_specs=[
                pl.BlockSpec((2, tile_n), lambda i: (0, i)),          # pair ids
                pl.BlockSpec((HIDDEN, vp_pad), lambda i: (0, 0)),     # M_l (resident)
                pl.BlockSpec((HIDDEN, vp_pad), lambda i: (0, 0)),     # M_r (resident)
                pl.BlockSpec((HIDDEN, 1), lambda i: (0, 0)),          # b1
                pl.BlockSpec((NUM_CLASSES, HIDDEN), lambda i: (0, 0)),# W2^T
                pl.BlockSpec((NUM_CLASSES, 1), lambda i: (0, 0)),     # b2
            ],
            out_specs=pl.BlockSpec((OUT_W, tile_n), lambda i: (0, i)),
        ),
        compiler_params=pltpu.CompilerParams(
            dimension_semantics=("parallel",),
        ),
    )(ids_t, ml_t, mr_t, b1_c, w2_t, b2_c)

    return out[:, :n]                                    # (OUT_W, N)


def init_params(key):
    k_emb, k_w1, k_b1, k_w2, k_b2 = jax.random.split(key, 5)
    two_h = 2 * HIDDEN
    # PyTorch Linear default init: U(-1/sqrt(fan_in), 1/sqrt(fan_in))
    lim1 = 1.0 / jnp.sqrt(jnp.float32(two_h))
    lim2 = 1.0 / jnp.sqrt(jnp.float32(HIDDEN))
    return {
        "emb": jax.random.normal(k_emb, (VOCAB, HIDDEN), jnp.float32) * 0.02,
        "w1": jax.random.uniform(k_w1, (two_h, HIDDEN), jnp.float32, -lim1, lim1),
        "b1": jax.random.uniform(k_b1, (1, HIDDEN), jnp.float32, -lim1, lim1),
        "w2": jax.random.uniform(k_w2, (HIDDEN, NUM_CLASSES), jnp.float32, -lim2, lim2),
        "b2": jax.random.uniform(k_b2, (1, NUM_CLASSES), jnp.float32, -lim2, lim2),
    }


def clone_model_forward(source_ids, params, labels=None):
    # source_ids: [B, 2*L] -> view(-1, L); the roberta stand-in only needs
    # token 0 of each snippet, so gather just those ids (no [2B, L, H] tensor).
    first_ids = source_ids.reshape(-1, MAX_SOURCE_LENGTH)[:, 0]      # [2B]
    pair_ids = first_ids.reshape(-1, 2).astype(jnp.int32)            # [B, 2]

    slab = clone_head(pair_ids, params["emb"], params["w1"], params["b1"],
                      params["w2"], params["b2"])                    # [5, B]
    logits = slab[0:NUM_CLASSES, :].T                                # [B, 2]
    prob = slab[NUM_CLASSES:2 * NUM_CLASSES, :].T                    # [B, 2]
    lse = slab[2 * NUM_CLASSES, :]                                   # [B]

    if labels is not None:
        # nn.CrossEntropyLoss (mean reduction) using the kernel's fused LSE.
        picked = jnp.take_along_axis(logits, labels[:, None], axis=-1)[:, 0]
        loss = jnp.mean(lse - picked)
        return loss, prob
    return prob


def _reference_forward(source_ids, params, labels=None):
    # Pure-JAX reference of the same semantics (for correctness check).
    first_ids = source_ids.reshape(-1, MAX_SOURCE_LENGTH)[:, 0]
    vec = params["emb"][first_ids]                                   # [2B, H]
    x = vec.reshape(-1, 2 * HIDDEN)
    h = jnp.tanh(x @ params["w1"] + params["b1"])
    logits = h @ params["w2"] + params["b2"]
    prob = jax.nn.softmax(logits, axis=-1)
    if labels is not None:
        log_z = jax.nn.logsumexp(logits, axis=-1)
        picked = jnp.take_along_axis(logits, labels[:, None], axis=-1)[:, 0]
        return jnp.mean(log_z - picked), prob
    return prob


if __name__ == "__main__":
    key = jax.random.PRNGKey(0)
    k_params, k_ids, k_lab = jax.random.split(key, 3)

    params = init_params(k_params)

    batch = 2
    # each row holds a pair of code snippets: [B, 2 * max_source_length]
    source_ids = jax.random.randint(
        k_ids, (batch, 2 * MAX_SOURCE_LENGTH), 1, VOCAB, dtype=jnp.int32)
    labels = jax.random.randint(k_lab, (batch,), 0, NUM_CLASSES, dtype=jnp.int32)

    loss, prob = clone_model_forward(source_ids, params, labels=labels)
    prob_only = clone_model_forward(source_ids, params)
    jax.block_until_ready((loss, prob, prob_only))

    # Correctness vs pure-JAX reference.
    ref_loss, ref_prob = _reference_forward(source_ids, params, labels=labels)
    assert prob.shape == (batch, NUM_CLASSES)
    assert jnp.allclose(jnp.sum(prob, axis=-1), 1.0, atol=1e-3)
    assert jnp.allclose(prob, ref_prob, atol=2e-3, rtol=2e-3)
    assert jnp.allclose(prob_only, ref_prob, atol=2e-3, rtol=2e-3)
    assert jnp.allclose(loss, ref_loss, atol=2e-3, rtol=2e-3)

    print("KERNEL_OK")
</pallas_src>

<mosaic_0001>
module attributes {stable_mosaic.version = 11 : i64} {
  func.func @clone_head_kernel(%arg0: i32, %arg1: memref<2x128xi32, #tpu.memory_space<vmem>>, %arg2: memref<32x56xf32, #tpu.memory_space<vmem>>, %arg3: memref<32x56xf32, #tpu.memory_space<vmem>>, %arg4: memref<32x1xf32, #tpu.memory_space<vmem>>, %arg5: memref<2x32xf32, #tpu.memory_space<vmem>>, %arg6: memref<2x1xf32, #tpu.memory_space<vmem>>, %arg7: memref<5x128xf32, #tpu.memory_space<vmem>>) attributes {dimension_semantics = [#tpu.dimension_semantics<parallel>], iteration_bounds = array<i64: 1>, scalar_prefetch = 0 : i64, scratch_operands = 0 : i64, tpu.core_type = #tpu.core_type<tc>, window_params = [{transform_indices = @transform_0, window_bounds = array<i64: 2, 128>}, {pipeline_mode = #tpu.pipeline_mode<synchronous>, transform_indices = @transform_1, window_bounds = array<i64: 32, 56>}, {pipeline_mode = #tpu.pipeline_mode<synchronous>, transform_indices = @transform_2, window_bounds = array<i64: 32, 56>}, {pipeline_mode = #tpu.pipeline_mode<synchronous>, transform_indices = @transform_3, window_bounds = array<i64: 32, 1>}, {pipeline_mode = #tpu.pipeline_mode<synchronous>, transform_indices = @transform_4, window_bounds = array<i64: 2, 32>}, {pipeline_mode = #tpu.pipeline_mode<synchronous>, transform_indices = @transform_5, window_bounds = array<i64: 2, 1>}, {transform_indices = @transform_6, window_bounds = array<i64: 5, 128>}]} {
    %c0 = arith.constant 0 : index
    %c0_0 = arith.constant 0 : index
    %0 = vector.load %arg1[%c0, %c0_0] : memref<2x128xi32, #tpu.memory_space<vmem>>, vector<2x128xi32>
    %c0_1 = arith.constant 0 : index
    %c0_2 = arith.constant 0 : index
    %1 = vector.load %arg2[%c0_1, %c0_2] : memref<32x56xf32, #tpu.memory_space<vmem>>, vector<32x56xf32>
    %c0_3 = arith.constant 0 : index
    %c0_4 = arith.constant 0 : index
    %2 = vector.load %arg3[%c0_3, %c0_4] : memref<32x56xf32, #tpu.memory_space<vmem>>, vector<32x56xf32>
    %3 = tpu.iota {dimensions = array<i32: 0>} : vector<56x128xi32>
    %4 = vector.extract_strided_slice %0 {offsets = [0, 0], sizes = [1, 128], strides = [1, 1]} : vector<2x128xi32> to vector<1x128xi32>
    %5 = vector.broadcast %4 : vector<1x128xi32> to vector<56x128xi32>
    %6 = arith.cmpi eq, %3, %5 : vector<56x128xi32>
    %7 = arith.extui %6 : vector<56x128xi1> to vector<56x128xi32>
    %8 = arith.sitofp %7 : vector<56x128xi32> to vector<56x128xf32>
    %9 = vector.extract_strided_slice %0 {offsets = [1, 0], sizes = [1, 128], strides = [1, 1]} : vector<2x128xi32> to vector<1x128xi32>
    %10 = vector.broadcast %9 : vector<1x128xi32> to vector<56x128xi32>
    %11 = arith.cmpi eq, %3, %10 : vector<56x128xi32>
    %12 = arith.extui %11 : vector<56x128xi1> to vector<56x128xi32>
    %13 = arith.sitofp %12 : vector<56x128xi32> to vector<56x128xf32>
    %cst = arith.constant dense<0.000000e+00> : vector<32x128xf32>
    %14 = tpu.matmul %1, %8, %cst {dimension_numbers = #tpu.dot_dimension_numbers<[1], [0], [0], [1], [0, 0, 1, 1], [], []>} : vector<32x56xf32>, vector<56x128xf32>, vector<32x128xf32> -> vector<32x128xf32>
    %cst_5 = arith.constant dense<0.000000e+00> : vector<32x128xf32>
    %15 = tpu.matmul %2, %13, %cst_5 {dimension_numbers = #tpu.dot_dimension_numbers<[1], [0], [0], [1], [0, 0, 1, 1], [], []>} : vector<32x56xf32>, vector<56x128xf32>, vector<32x128xf32> -> vector<32x128xf32>
    %16 = arith.addf %14, %15 : vector<32x128xf32>
    %c0_6 = arith.constant 0 : index
    %c0_7 = arith.constant 0 : index
    %17 = vector.load %arg4[%c0_6, %c0_7] : memref<32x1xf32, #tpu.memory_space<vmem>>, vector<32x1xf32>
    %18 = vector.broadcast %17 : vector<32x1xf32> to vector<32x128xf32>
    %19 = arith.addf %16, %18 : vector<32x128xf32>
    %20 = math.tanh %19 : vector<32x128xf32>
    %c0_8 = arith.constant 0 : index
    %c0_9 = arith.constant 0 : index
    %21 = vector.load %arg5[%c0_8, %c0_9] : memref<2x32xf32, #tpu.memory_space<vmem>>, vector<2x32xf32>
    %cst_10 = arith.constant dense<0.000000e+00> : vector<2x128xf32>
    %22 = tpu.matmul %21, %20, %cst_10 {dimension_numbers = #tpu.dot_dimension_numbers<[1], [0], [0], [1], [0, 0, 1, 1], [], []>} : vector<2x32xf32>, vector<32x128xf32>, vector<2x128xf32> -> vector<2x128xf32>
    %c0_11 = arith.constant 0 : index
    %c0_12 = arith.constant 0 : index
    %23 = vector.load %arg6[%c0_11, %c0_12] : memref<2x1xf32, #tpu.memory_space<vmem>>, vector<2x1xf32>
    %24 = vector.broadcast %23 : vector<2x1xf32> to vector<2x128xf32>
    %25 = arith.addf %22, %24 : vector<2x128xf32>
    %26 = vector.extract_strided_slice %25 {offsets = [0, 0], sizes = [1, 128], strides = [1, 1]} : vector<2x128xf32> to vector<1x128xf32>
    %27 = vector.extract_strided_slice %25 {offsets = [1, 0], sizes = [1, 128], strides = [1, 1]} : vector<2x128xf32> to vector<1x128xf32>
    %28 = arith.maximumf %26, %27 : vector<1x128xf32>
    %29 = arith.subf %26, %28 : vector<1x128xf32>
    %30 = math.exp %29 : vector<1x128xf32>
    %31 = arith.subf %27, %28 : vector<1x128xf32>
    %32 = math.exp %31 : vector<1x128xf32>
    %33 = arith.addf %30, %32 : vector<1x128xf32>
    %34 = tpu.reciprocal %33 : vector<1x128xf32> -> vector<1x128xf32>
    %35 = math.log %33 : vector<1x128xf32>
    %36 = arith.addf %28, %35 : vector<1x128xf32>
    %c0_13 = arith.constant 0 : index
    %c0_14 = arith.constant 0 : index
    %37 = vector.load %arg7[%c0_13, %c0_14] : memref<5x128xf32, #tpu.memory_space<vmem>>, vector<2x128xf32>
    tpu.vector_store %arg7[%c0_13, %c0_14], %25 {strides = array<i32>} : memref<5x128xf32, #tpu.memory_space<vmem>>, vector<2x128xf32>,
    %38 = arith.mulf %30, %34 : vector<1x128xf32>
    %c2 = arith.constant 2 : index
    %c0_15 = arith.constant 0 : index
    %39 = vector.load %arg7[%c2, %c0_15] : memref<5x128xf32, #tpu.memory_space<vmem>>, vector<1x128xf32>
    tpu.vector_store %arg7[%c2, %c0_15], %38 {strides = array<i32>} : memref<5x128xf32, #tpu.memory_space<vmem>>, vector<1x128xf32>,
    %40 = arith.mulf %32, %34 : vector<1x128xf32>
    %c3 = arith.constant 3 : index
    %c0_16 = arith.constant 0 : index
    %41 = vector.load %arg7[%c3, %c0_16] : memref<5x128xf32, #tpu.memory_space<vmem>>, vector<1x128xf32>
    tpu.vector_store %arg7[%c3, %c0_16], %40 {strides = array<i32>} : memref<5x128xf32, #tpu.memory_space<vmem>>, vector<1x128xf32>,
    %c4 = arith.constant 4 : index
    %c0_17 = arith.constant 0 : index
    %42 = vector.load %arg7[%c4, %c0_17] : memref<5x128xf32, #tpu.memory_space<vmem>>, vector<1x128xf32>
    tpu.vector_store %arg7[%c4, %c0_17], %36 {strides = array<i32>} : memref<5x128xf32, #tpu.memory_space<vmem>>, vector<1x128xf32>,
    return
  }
  func.func @transform_0(%arg0: i32) -> (i32, i32) {
    %c0_i32 = arith.constant 0 : i32
    %c0_i32_0 = arith.constant 0 : i32
    return %c0_i32, %arg0 : i32, i32
  }
  func.func @transform_1(%arg0: i32) -> (i32, i32) {
    %c0_i32 = arith.constant 0 : i32
    %c0_i32_0 = arith.constant 0 : i32
    %c0_i32_1 = arith.constant 0 : i32
    return %c0_i32, %c0_i32_0 : i32, i32
  }
  func.func @transform_2(%arg0: i32) -> (i32, i32) {
    %c0_i32 = arith.constant 0 : i32
    %c0_i32_0 = arith.constant 0 : i32
    %c0_i32_1 = arith.constant 0 : i32
    return %c0_i32, %c0_i32_0 : i32, i32
  }
  func.func @transform_3(%arg0: i32) -> (i32, i32) {
    %c0_i32 = arith.constant 0 : i32
    %c0_i32_0 = arith.constant 0 : i32
    %c0_i32_1 = arith.constant 0 : i32
    return %c0_i32, %c0_i32_0 : i32, i32
  }
  func.func @transform_4(%arg0: i32) -> (i32, i32) {
    %c0_i32 = arith.constant 0 : i32
    %c0_i32_0 = arith.constant 0 : i32
    %c0_i32_1 = arith.constant 0 : i32
    return %c0_i32, %c0_i32_0 : i32, i32
  }
  func.func @transform_5(%arg0: i32) -> (i32, i32) {
    %c0_i32 = arith.constant 0 : i32
    %c0_i32_0 = arith.constant 0 : i32
    %c0_i32_1 = arith.constant 0 : i32
    return %c0_i32, %c0_i32_0 : i32, i32
  }
  func.func @transform_6(%arg0: i32) -> (i32, i32) {
    %c0_i32 = arith.constant 0 : i32
    %c0_i32_0 = arith.constant 0 : i32
    return %c0_i32, %arg0 : i32, i32
  }
}

</mosaic_0001>

<llo_original>
// kernel: tpu_custom_call.1
$region0: #{tpu_custom_call.1}
  #allocation0 [shape = 'u32[]', space=smem, size = 0x4, offset = 0x4, fixed_abs, tag = 'smem constant byte address 0x4 - core index']
  #allocation1 [shape = 'u32[144,128]{1,0:T(1,128)}', space=vmem, size = 0x12000, scoped, tag = 'internal scratch']
  %s0 = inlined_call_operand.vmem [shape: s32[2,128], index: 0, kind: input, shape index: {}]
  %s1 = inlined_call_operand.vmem [shape: f32[32,56], index: 1, kind: input, shape index: {}]
  %s2 = inlined_call_operand.hbm [shape: f32[32,56], index: 2, kind: input, shape index: {}]
  %s3 = inlined_call_operand.vmem [shape: f32[32,1], index: 3, kind: input, shape index: {}]
  %s4 = inlined_call_operand.vmem [shape: f32[2,32], index: 4, kind: input, shape index: {}]
  %s5 = inlined_call_operand.vmem [shape: f32[2,1], index: 5, kind: input, shape index: {}]
  %s6 = inlined_call_operand.hbm [shape: f32[5,128], index: 6, kind: output, shape index: {}]
  %s7 = sld [smem:[#allocation0]]
  $region38: #{tpu_custom_call.1} parent=0
    _
  %s9 = ssub.s32 1, %s7
  %s10 = scalar_select 0, %s9, %s7
  $region1: #{tpu_custom_call.1} parent=0
    #allocation2 [shape = 'u8[16384]{0}', space=vmem, size = 0x4000, scoped, tag = 'input window, operand 2, single buffered']
    #allocation3 [shape = 's32[1]{0}', space=sflag, size = 0x4, scoped, tag = 'scoped memory for tpu_custom_call.1']
    #allocation4 [shape = 's32[1]{0}', space=sflag, size = 0x4, scoped, tag = 'scoped memory for tpu_custom_call.1']
    #allocation5 [shape = 'u8[4096]{0}', space=vmem, size = 0x1000, scoped, tag = 'output window, operand 0, single buffered']
    %11 = vsyncpa [#allocation3], 0
    %12 = vsyncpa [#allocation4], 0
    // Predicated region
    $region2: #{tpu_custom_call.1} parent=1 // pred_check
      _
    $region3: #{tpu_custom_call.1} parent=1 // pred_check_branch
      %14 = sbr.rel (0) target = $region5
    $region4: #{tpu_custom_call.1} parent=1 // pred_region
      _
    $region5: #{tpu_custom_call.1} parent=1 // pred_fallthru
      _
    // Predicated region
    $region6: #{tpu_custom_call.1} parent=1 // pred_check
      _
    $region7: #{tpu_custom_call.1} parent=1 // pred_check_branch
      %16 = sbr.rel (0) target = $region9
    $region8: #{tpu_custom_call.1} parent=1 // pred_region
      _
    $region9: #{tpu_custom_call.1} parent=1 // pred_fallthru
      _
    // Predicated region
    $region10: #{tpu_custom_call.1} parent=1 // pred_check
      _
    $region11: #{tpu_custom_call.1} parent=1 // pred_check_branch
      %18 = sbr.rel (0) target = $region13
    $region12: #{tpu_custom_call.1} parent=1 // pred_region
      %s20 = ssub.s32 512, 512
      %21 = vsyncadd [#allocation3], %s20
      %s22 = sshll.u32 [#allocation2], 4
      %s23 = int_to_ptr.vmem [resolvable:$true] %s22
      %28 = dma.hbm_to_vmem [thread:$0]  %s2, 512, %s23, [#allocation3], 128, 128, 8
    $region13: #{tpu_custom_call.1} parent=1 // pred_fallthru
      _
    // Predicated region
    $region14: #{tpu_custom_call.1} parent=1 // pred_check
      _
    $region15: #{tpu_custom_call.1} parent=1 // pred_check_branch
      %30 = sbr.rel (0) target = $region17
    $region16: #{tpu_custom_call.1} parent=1 // pred_region
      _
    $region17: #{tpu_custom_call.1} parent=1 // pred_fallthru
      _
    // Predicated region
    $region18: #{tpu_custom_call.1} parent=1 // pred_check
      _
    $region19: #{tpu_custom_call.1} parent=1 // pred_check_branch
      %32 = sbr.rel (0) target = $region21
    $region20: #{tpu_custom_call.1} parent=1 // pred_region
      _
    $region21: #{tpu_custom_call.1} parent=1 // pred_fallthru
      _
    // Predicated region
    $region22: #{tpu_custom_call.1} parent=1 // pred_check
      _
    $region23: #{tpu_custom_call.1} parent=1 // pred_check_branch
      %34 = sbr.rel (0) target = $region25
    $region24: #{tpu_custom_call.1} parent=1 // pred_region
      _
    $region25: #{tpu_custom_call.1} parent=1 // pred_fallthru
      _
    // Predicated region
    $region26: #{tpu_custom_call.1} parent=1 // pred_check
      _
    $region27: #{tpu_custom_call.1} parent=1 // pred_check_branch
      %36 = sbr.rel (0) target = $region29
    $region28: #{tpu_custom_call.1} parent=1 // pred_region
      %37 = dma.done [#allocation3], 512
    $region29: #{tpu_custom_call.1} parent=1 // pred_fallthru
      _
    %v38 = vld [vmem:[%s0] sm:$0x3]
    %v39 = vld [vmem:[%s1] sm:$0xff]
    %v40 = vld [vmem:[%s1 + $0x8] sm:$0xff]
    %v41 = vld [vmem:[%s1 + $0x10] sm:$0xff]
    %v42 = vld [vmem:[%s1 + $0x18] sm:$0xff]
    %v43 = vld [vmem:[#allocation2] sm:$0xff]
    %v44 = vld [vmem:[#allocation2 + $0x8] sm:$0xff]
    %v45 = vld [vmem:[#allocation2 + $0x10] sm:$0xff]
    %v46 = vld [vmem:[#allocation2 + $0x18] sm:$0xff]
    %v47 = vlaneseq
    %v48 = vshrl.u32 %v47, 7
    %v49 = vadd.s32 %v48, 8
    %v50 = vadd.s32 %v48, 16
    %v51 = vadd.s32 %v48, 24
    %v52 = vadd.s32 %v48, 32
    %v53 = vadd.s32 %v48, 40
    %v54 = vadd.s32 %v48, 48
    %v55 = vlaneseq
    %v56 = vshrl.u32 %v55, 7
    %v57 = vsub.s32 0, %v56
    %v58 = vrot.slane %v38, %v57
    %vm59 = vcmp.eq.s32.totalorder %v48, %v58
    %vm60 = vcmp.eq.s32.totalorder %v49, %v58
    %vm61 = vcmp.eq.s32.totalorder %v50, %v58
    %vm62 = vcmp.eq.s32.totalorder %v51, %v58
    %vm63 = vcmp.eq.s32.totalorder %v52, %v58
    %vm64 = vcmp.eq.s32.totalorder %v53, %v58
    %vm65 = vcmp.eq.s32.totalorder %v54, %v58
    %v66 = vsel %vm59, 1, 0
    %v67 = vsel %vm60, 1, 0
    %v68 = vsel %vm61, 1, 0
    %v69 = vsel %vm62, 1, 0
    %v70 = vsel %vm63, 1, 0
    %v71 = vsel %vm64, 1, 0
    %v72 = vsel %vm65, 1, 0
    %v73 = vcvt.s32.f32 %v66
    %v74 = vcvt.s32.f32 %v67
    %v75 = vcvt.s32.f32 %v68
    %v76 = vcvt.s32.f32 %v69
    %v77 = vcvt.s32.f32 %v70
    %v78 = vcvt.s32.f32 %v71
    %v79 = vcvt.s32.f32 %v72
    %v80 = vlaneseq
    %v81 = vshrl.u32 %v80, 7
    %v82 = vsub.s32 1, %v81
    %v83 = vrot.slane %v38, %v82
    %vm84 = vcmp.eq.s32.totalorder %v48, %v83
    %vm85 = vcmp.eq.s32.totalorder %v49, %v83
    %vm86 = vcmp.eq.s32.totalorder %v50, %v83
    %vm87 = vcmp.eq.s32.totalorder %v51, %v83
    %vm88 = vcmp.eq.s32.totalorder %v52, %v83
    %vm89 = vcmp.eq.s32.totalorder %v53, %v83
    %vm90 = vcmp.eq.s32.totalorder %v54, %v83
    %v91 = vsel %vm84, 1, 0
    %v92 = vsel %vm85, 1, 0
    %v93 = vsel %vm86, 1, 0
    %v94 = vsel %vm87, 1, 0
    %v95 = vsel %vm88, 1, 0
    %v96 = vsel %vm89, 1, 0
    %v97 = vsel %vm90, 1, 0
    %v98 = vcvt.s32.f32 %v91
    %v99 = vcvt.s32.f32 %v92
    %v100 = vcvt.s32.f32 %v93
    %v101 = vcvt.s32.f32 %v94
    %v102 = vcvt.s32.f32 %v95
    %v103 = vcvt.s32.f32 %v96
    %v104 = vcvt.s32.f32 %v97
    %vm105 = vcmask 457728
    %v107 = vsel %vm105, %v43, 0
    %v110 = vsel %vm105, %v44, 0
    %v113 = vsel %vm105, %v45, 0
    %v116 = vsel %vm105, %v46, 0
    %118 = vmatprep.subr.mxu0 0.0
    %119 = vmatpush1.msra.mxu0 %v98
    %120 = vmatprep.subr.mxu0 0.0
    %121 = vmatpush1.msra.mxu0 %v99
    %122 = vmatprep.subr.mxu0 0.0
    %123 = vmatpush1.msra.mxu0 %v100
    %124 = vmatprep.subr.mxu0 0.0
    %125 = vmatpush1.msra.mxu0 %v101
    %126 = vmatprep.subr.mxu0 0.0
    %127 = vmatpush1.msra.mxu0 %v102
    %128 = vmatprep.subr.mxu0 0.0
    %129 = vmatpush1.msra.mxu0 %v103
    %130 = vmatprep.subr.mxu0 0.0
    %131 = vmatpush1.msra.mxu0 %v104
    %132 = vmatprep.subr.mxu0 0.0
    %133 = vmatpush1.msra.mxu0 0.0
    %134 = vmatprep.subr.mxu0 0.0
    %135 = vmatpush1.msra.mxu0 0.0
    %136 = vmatprep.subr.mxu0 0.0
    %137 = vmatpush1.msra.mxu0 0.0
    %138 = vmatprep.subr.mxu0 0.0
    %139 = vmatpush1.msra.mxu0 0.0
    %140 = vmatprep.subr.mxu0 0.0
    %141 = vmatpush1.msra.mxu0 0.0
    %142 = vmatprep.subr.mxu0 0.0
    %143 = vmatpush1.msra.mxu0 0.0
    %144 = vmatprep.subr.mxu0 0.0
    %145 = vmatpush1.msra.mxu0 0.0
    %146 = vmatprep.subr.mxu0 0.0
    %147 = vmatpush1.msra.mxu0 0.0
    %148 = vmatprep.subr.mxu0 0.0
    %149 = vmatpush1.msra.mxu0 0.0
    %150 = vmatprep.subr.mxu0 0.0
    %151 = vmatpush1.msra.mxu0 0.0
    %152 = vmatprep.subr.mxu0 0.0
    %153 = vmatpush1.msra.mxu0 0.0
    %154 = vmatprep.subr.mxu0 0.0
    %155 = vmatpush1.msra.mxu0 0.0
    %156 = vmatprep.subr.mxu0 0.0
    %157 = vmatpush1.msra.mxu0 0.0
    %158 = vmatprep.subr.mxu0 0.0
    %159 = vmatpush1.msra.mxu0 0.0
    %160 = vmatprep.subr.mxu0 0.0
    %161 = vmatpush1.msra.mxu0 0.0
    %162 = vmatprep.subr.mxu0 0.0
    %163 = vmatpush1.msra.mxu0 0.0
    %164 = vmatprep.subr.mxu0 0.0
    %165 = vmatpush1.msra.mxu0 0.0
    %166 = vmatprep.subr.mxu0 0.0
    %167 = vmatpush1.msra.mxu0 0.0
    %168 = vmatprep.subr.mxu0 0.0
    %169 = vmatpush1.msra.mxu0 0.0
    %170 = vmatprep.subr.mxu0 0.0
    %171 = vmatpush1.msra.mxu0 0.0
    %172 = vmatprep.subr.mxu0 0.0
    %173 = vmatpush1.msra.mxu0 0.0
    %174 = vmatprep.subr.mxu0 0.0
    %175 = vmatpush1.msra.mxu0 0.0
    %176 = vmatprep.subr.mxu0 0.0
    %177 = vmatpush1.msra.mxu0 0.0
    %178 = vmatprep.subr.mxu0 0.0
    %179 = vmatpush1.msra.mxu0 0.0
    %180 = vmatprep.subr.mxu0 0.0
    %181 = vmatpush1.msra.mxu0 0.0
    %182 = vmatprep.mubr.f32.mxu0 0.0
    %183 = vmatmul.mubr.f32.gmra.mrb[0].mxu0 %v107
    %v184 = vpop.f32.mrb[0].mxu0
    %v185 = vadd.f32 0.0, %v184
    %v186 = vpop.f32.mrb[0].mxu0
    %187 = vmatprep.mubr.f32.mxu0 0.0
    %188 = vmatmul.mubr.f32.gmra.mrb[0].mxu0 %v110
    %v189 = vpop.f32.mrb[0].mxu0
    %v190 = vadd.f32 0.0, %v189
    %v191 = vpop.f32.mrb[0].mxu0
    %192 = vmatprep.mubr.f32.mxu0 0.0
    %193 = vmatmul.mubr.f32.gmra.mrb[0].mxu0 %v113
    %v194 = vpop.f32.mrb[0].mxu0
    %v195 = vadd.f32 0.0, %v194
    %v196 = vpop.f32.mrb[0].mxu0
    %197 = vmatprep.mubr.f32.mxu0 0.0
    %198 = vmatmul.mubr.f32.gmra.mrb[0].mxu0 %v116
    %v199 = vpop.f32.mrb[0].mxu0
    %v200 = vadd.f32 0.0, %v199
    %v201 = vpop.f32.mrb[0].mxu0
    %202 = vdwg.mxu0
    %v204 = vsel %vm105, %v39, 0
    %v207 = vsel %vm105, %v40, 0
    %v210 = vsel %vm105, %v41, 0
    %v213 = vsel %vm105, %v42, 0
    %215 = vmatprep.subr.mxu0 0.0
    %216 = vmatpush1.msra.mxu0 %v73
    %217 = vmatprep.subr.mxu0 0.0
    %218 = vmatpush1.msra.mxu0 %v74
    %219 = vmatprep.subr.mxu0 0.0
    %220 = vmatpush1.msra.mxu0 %v75
    %221 = vmatprep.subr.mxu0 0.0
    %222 = vmatpush1.msra.mxu0 %v76
    %223 = vmatprep.subr.mxu0 0.0
    %224 = vmatpush1.msra.mxu0 %v77
    %225 = vmatprep.subr.mxu0 0.0
    %226 = vmatpush1.msra.mxu0 %v78
    %227 = vmatprep.subr.mxu0 0.0
    %228 = vmatpush1.msra.mxu0 %v79
    %229 = vmatprep.subr.mxu0 0.0
    %230 = vmatpush1.msra.mxu0 0.0
    %231 = vmatprep.subr.mxu0 0.0
    %232 = vmatpush1.msra.mxu0 0.0
    %233 = vmatprep.subr.mxu0 0.0
    %234 = vmatpush1.msra.mxu0 0.0
    %235 = vmatprep.subr.mxu0 0.0
    %236 = vmatpush1.msra.mxu0 0.0
    %237 = vmatprep.subr.mxu0 0.0
    %238 = vmatpush1.msra.mxu0 0.0
    %239 = vmatprep.subr.mxu0 0.0
    %240 = vmatpush1.msra.mxu0 0.0
    %241 = vmatprep.subr.mxu0 0.0
    %242 = vmatpush1.msra.mxu0 0.0
    %243 = vmatprep.subr.mxu0 0.0
    %244 = vmatpush1.msra.mxu0 0.0
    %245 = vmatprep.subr.mxu0 0.0
    %246 = vmatpush1.msra.mxu0 0.0
    %247 = vmatprep.subr.mxu0 0.0
    %248 = vmatpush1.msra.mxu0 0.0
    %249 = vmatprep.subr.mxu0 0.0
    %250 = vmatpush1.msra.mxu0 0.0
    %251 = vmatprep.subr.mxu0 0.0
    %252 = vmatpush1.msra.mxu0 0.0
    %253 = vmatprep.subr.mxu0 0.0
    %254 = vmatpush1.msra.mxu0 0.0
    %255 = vmatprep.subr.mxu0 0.0
    %256 = vmatpush1.msra.mxu0 0.0
    %257 = vmatprep.subr.mxu0 0.0
    %258 = vmatpush1.msra.mxu0 0.0
    %259 = vmatprep.subr.mxu0 0.0
    %260 = vmatpush1.msra.mxu0 0.0
    %261 = vmatprep.subr.mxu0 0.0
    %262 = vmatpush1.msra.mxu0 0.0
    %263 = vmatprep.subr.mxu0 0.0
    %264 = vmatpush1.msra.mxu0 0.0
    %265 = vmatprep.subr.mxu0 0.0
    %266 = vmatpush1.msra.mxu0 0.0
    %267 = vmatprep.subr.mxu0 0.0
    %268 = vmatpush1.msra.mxu0 0.0
    %269 = vmatprep.subr.mxu0 0.0
    %270 = vmatpush1.msra.mxu0 0.0
    %271 = vmatprep.subr.mxu0 0.0
    %272 = vmatpush1.msra.mxu0 0.0
    %273 = vmatprep.subr.mxu0 0.0
    %274 = vmatpush1.msra.mxu0 0.0
    %275 = vmatprep.subr.mxu0 0.0
    %276 = vmatpush1.msra.mxu0 0.0
    %277 = vmatprep.subr.mxu0 0.0
    %278 = vmatpush1.msra.mxu0 0.0
    %279 = vmatprep.mubr.f32.mxu0 0.0
    %280 = vmatmul.mubr.f32.gmra.mrb[0].mxu0 %v204
    %v281 = vpop.f32.mrb[0].mxu0
    %v282 = vadd.f32 %v185, %v281
    %v283 = vpop.f32.mrb[0].mxu0
    %284 = vmatprep.mubr.f32.mxu0 0.0
    %285 = vmatmul.mubr.f32.gmra.mrb[0].mxu0 %v207
    %v286 = vpop.f32.mrb[0].mxu0
    %v287 = vadd.f32 %v190, %v286
    %v288 = vpop.f32.mrb[0].mxu0
    %289 = vmatprep.mubr.f32.mxu0 0.0
    %290 = vmatmul.mubr.f32.gmra.mrb[0].mxu0 %v210
    %v291 = vpop.f32.mrb[0].mxu0
    %v292 = vadd.f32 %v195, %v291
    %v293 = vpop.f32.mrb[0].mxu0
    %294 = vmatprep.mubr.f32.mxu0 0.0
    %295 = vmatmul.mubr.f32.gmra.mrb[0].mxu0 %v213
    %v296 = vpop.f32.mrb[0].mxu0
    %v297 = vadd.f32 %v200, %v296
    %v298 = vpop.f32.mrb[0].mxu0
    %299 = vdwg.mxu0
    %v300 = vld [vmem:[%s3] sm:$0xff]
    %v301 = vld [vmem:[%s3 + $0x8] sm:$0xff]
    %v302 = vld [vmem:[%s3 + $0x10] sm:$0xff]
    %v303 = vld [vmem:[%s3 + $0x18] sm:$0xff]
    %305 = vset.pattern.permute.xlu0 0
    %306 = vperm.xlu0 %305, %v300
    %v307 = vpop.permute.xlu0 %306
    %310 = vset.pattern.permute.xlu0 0
    %311 = vperm.xlu0 %310, %v301
    %v312 = vpop.permute.xlu0 %311
    %315 = vset.pattern.permute.xlu0 0
    %316 = vperm.xlu0 %315, %v302
    %v317 = vpop.permute.xlu0 %316
    %320 = vset.pattern.permute.xlu0 0
    %321 = vperm.xlu0 %320, %v303
    %v322 = vpop.permute.xlu0 %321
    %v324 = vadd.f32 %v282, %v307
    %v325 = vadd.f32 %v287, %v312
    %v326 = vadd.f32 %v292, %v317
    %v327 = vadd.f32 %v297, %v322
    %v328 = vtanh.pop %v324
    %v329 = vtanh.pop %v325
    %v330 = vtanh.pop %v326
    %v331 = vtanh.pop %v327
    %v332 = vld [vmem:[%s4] sm:$0x3]
    %v333 = vld [vmem:[%s5] sm:$0x3]
    %335 = vset.pattern.permute.xlu0 0
    %336 = vperm.xlu0 %335, %v333
    %v337 = vpop.permute.xlu0 %336
    %vm339 = vcmask 261120
    %v341 = vsel %vm339, %v332, 0
    %343 = vmatprep.subr.mxu0 0.0
    %344 = vmatpush1.msra.mxu0 %v328
    %345 = vmatprep.subr.mxu0 0.0
    %346 = vmatpush1.msra.mxu0 %v329
    %347 = vmatprep.subr.mxu0 0.0
    %348 = vmatpush1.msra.mxu0 %v330
    %349 = vmatprep.subr.mxu0 0.0
    %350 = vmatpush1.msra.mxu0 %v331
    %351 = vmatprep.subr.mxu0 0.0
    %352 = vmatpush1.msra.mxu0 0.0
    %353 = vmatprep.subr.mxu0 0.0
    %354 = vmatpush1.msra.mxu0 0.0
    %355 = vmatprep.subr.mxu0 0.0
    %356 = vmatpush1.msra.mxu0 0.0
    %357 = vmatprep.subr.mxu0 0.0
    %358 = vmatpush1.msra.mxu0 0.0
    %359 = vmatprep.subr.mxu0 0.0
    %360 = vmatpush1.msra.mxu0 0.0
    %361 = vmatprep.subr.mxu0 0.0
    %362 = vmatpush1.msra.mxu0 0.0
    %363 = vmatprep.subr.mxu0 0.0
    %364 = vmatpush1.msra.mxu0 0.0
    %365 = vmatprep.subr.mxu0 0.0
    %366 = vmatpush1.msra.mxu0 0.0
    %367 = vmatprep.subr.mxu0 0.0
    %368 = vmatpush1.msra.mxu0 0.0
    %369 = vmatprep.subr.mxu0 0.0
    %370 = vmatpush1.msra.mxu0 0.0
    %371 = vmatprep.subr.mxu0 0.0
    %372 = vmatpush1.msra.mxu0 0.0
    %373 = vmatprep.subr.mxu0 0.0
    %374 = vmatpush1.msra.mxu0 0.0
    %375 = vmatprep.subr.mxu0 0.0
    %376 = vmatpush1.msra.mxu0 0.0
    %377 = vmatprep.subr.mxu0 0.0
    %378 = vmatpush1.msra.mxu0 0.0
    %379 = vmatprep.subr.mxu0 0.0
    %380 = vmatpush1.msra.mxu0 0.0
    %381 = vmatprep.subr.mxu0 0.0
    %382 = vmatpush1.msra.mxu0 0.0
    %383 = vmatprep.subr.mxu0 0.0
    %384 = vmatpush1.msra.mxu0 0.0
    %385 = vmatprep.subr.mxu0 0.0
    %386 = vmatpush1.msra.mxu0 0.0
    %387 = vmatprep.subr.mxu0 0.0
    %388 = vmatpush1.msra.mxu0 0.0
    %389 = vmatprep.subr.mxu0 0.0
    %390 = vmatpush1.msra.mxu0 0.0
    %391 = vmatprep.subr.mxu0 0.0
    %392 = vmatpush1.msra.mxu0 0.0
    %393 = vmatprep.subr.mxu0 0.0
    %394 = vmatpush1.msra.mxu0 0.0
    %395 = vmatprep.subr.mxu0 0.0
    %396 = vmatpush1.msra.mxu0 0.0
    %397 = vmatprep.subr.mxu0 0.0
    %398 = vmatpush1.msra.mxu0 0.0
    %399 = vmatprep.subr.mxu0 0.0
    %400 = vmatpush1.msra.mxu0 0.0
    %401 = vmatprep.subr.mxu0 0.0
    %402 = vmatpush1.msra.mxu0 0.0
    %403 = vmatprep.subr.mxu0 0.0
    %404 = vmatpush1.msra.mxu0 0.0
    %405 = vmatprep.subr.mxu0 0.0
    %406 = vmatpush1.msra.mxu0 0.0
    %407 = vmatprep.mubr.f32.mxu0 0.0
    %408 = vmatmul.mubr.f32.gmra.mrb[0].mxu0 %v341
    %v409 = vpop.f32.mrb[0].mxu0
    %v410 = vadd.f32 %v337, %v409
    %v411 = vpop.f32.mrb[0].mxu0
    %412 = vdwg.mxu0
    %v414 = vrot.slane %v410, 1
    %v416 = vmax.f32 %v410, %v414
    %v417 = vsub.f32 %v410, %v416
    %v418 = vmul.f32 %v417, 1.442695
    %v419 = vpow.pop %v418
    %v421 = vrot.slane %v416, 7
    %v423 = vsub.f32 %v410, %v421
    %v424 = vmul.f32 %v423, 1.442695
    %v425 = vpow.pop %v424
    %v427 = vrot.slane %v425, 1
    %v429 = vadd.f32 %v419, %v427
    %v430 = vrcp.pop %v429
    %v431 = vlog2.pop %v429
    %v432 = vmul.f32 %v431, 0.6931472
    %v433 = vadd.f32 %v416, %v432
    %434 = vst [vmem:[#allocation5] sm:$0x3] %v410
    %v435 = vmul.f32 %v419, %v430
    %436 = vst [vmem:[#allocation5 + $0x2] sm:$0x1] %v435
    %v438 = vrot.slane %v430, 7
    %v440 = vmul.f32 %v425, %v438
    %441 = vst [vmem:[#allocation5 + $0x2] sm:$0x2] %v440
    %442 = vst [vmem:[#allocation5 + $0x4] sm:$0x1] %v433
    // Predicated region
    $region30: #{tpu_custom_call.1} parent=1 // pred_check
      _
    $region31: #{tpu_custom_call.1} parent=1 // pred_check_branch
      %444 = sbr.rel (0) target = $region33
    $region32: #{tpu_custom_call.1} parent=1 // pred_region
      %s446 = ssub.s32 128, 128
      %447 = vsyncadd [#allocation4], %s446
      %s449 = sshll.u32 [#allocation5], 4
      %s450 = int_to_ptr.vmem [resolvable:$true] %s449
      %452 = dma.vmem_to_hbm [thread:$0]  %s450, 128, %s6, [#allocation4]
    $region33: #{tpu_custom_call.1} parent=1 // pred_fallthru
      _
    // Predicated region
    $region34: #{tpu_custom_call.1} parent=1 // pred_check
      _
    $region35: #{tpu_custom_call.1} parent=1 // pred_check_branch
      %454 = sbr.rel (0) target = $region37
    $region36: #{tpu_custom_call.1} parent=1 // pred_region
      %455 = dma.done [#allocation4], 128
    $region37: #{tpu_custom_call.1} parent=1 // pred_fallthru
      _
    %456 = vsyncpa [#allocation3], 1
    %457 = vsyncpa [#allocation4], 1

</llo_original>
